<compile_context>
chip_gen: v6e
topology: v6e:2x2x1
jax: 0.10.0
libtpu: 0.0.40
codegen_flags: <defaults>
</compile_context>

<pallas_src>
import jax
import jax.numpy as jnp
from jax.experimental import pallas as pl
from jax.experimental.pallas import tpu as pltpu


_LANES = 128  # MXU/vreg lane width; weight columns padded once to a full tile


def _round_up(x: int, m: int) -> int:
    return ((x + m - 1) // m) * m


def prepare_classifier_params(weight, bias):
    """One-time (parameter-load-time) prep of Linear(vec_size, 3) params.

    weight: (N, H) PyTorch Linear layout (out_features, in_features)
    bias:   (N,)
    Returns (w_p, b_p, N): (H, 128) bf16 weight, (1, 128) f32 bias.
    Zero padding in the extra columns keeps padded logits harmless (never stored).
    """
    N, H = weight.shape
    assert bias.shape == (N,) and 0 < N <= _LANES
    w_p = jnp.zeros((H, _LANES), dtype=jnp.bfloat16).at[:, :N].set(
        weight.T.astype(jnp.bfloat16))
    b_p = jnp.zeros((1, _LANES), dtype=jnp.float32).at[0, :N].set(
        bias.astype(jnp.float32))
    return w_p, b_p, N


def _classifier_head_kernel(x_ref, w_ref, b_ref, o_ref):
    # x_ref: (TM, H) input dtype, w_ref: (H, 128) bf16, b_ref: (1, 128) f32,
    # o_ref: (TM, N) f32.  In-kernel bf16 cast, MXU matmul with f32 accumulation,
    # f32 bias add, store only the N true logit lanes.
    x = x_ref[...].astype(w_ref.dtype)
    logits = jnp.dot(x, w_ref[...], preferred_element_type=jnp.float32)
    logits = logits + b_ref[...]
    o_ref[...] = logits[:, : o_ref.shape[-1]].astype(o_ref.dtype)


def bbqq_classifier_head(x, w_p, b_p, num_classes, *, tm: int = 1024):
    """Pallas linear head: (B, H) @ (H, N) + (N,) -> (B, N), N=3.

    x:   (B, H) activations ([CLS] pooled vector per example), any float dtype.
    w_p: (H, 128) bf16 pre-padded weight from prepare_classifier_params.
    b_p: (1, 128) f32 pre-padded bias.
    """
    B, H = x.shape
    H_w, n_pad = w_p.shape
    assert H_w == H and n_pad == _LANES
    assert b_p.shape == (1, n_pad)
    assert 0 < num_classes <= n_pad

    # ---- batch tile: >=2 grid steps when possible (v7x dual-TC), VMEM-capped ----
    tm_eff = max(8, min(tm, _round_up(pl.cdiv(B, 2), 8)))
    x_bytes = jnp.dtype(x.dtype).itemsize
    vmem_cap_rows = max(8, ((16 * 1024 * 1024) // (2 * H * x_bytes)) // 8 * 8)
    tm_eff = min(tm_eff, vmem_cap_rows)

    grid = (pl.cdiv(B, tm_eff),)

    cost = pl.CostEstimate(
        flops=2 * B * H * n_pad,
        transcendentals=0,
        bytes_accessed=B * H * x_bytes
        + H * n_pad * 2          # bf16 weight, DMA'd once (resident)
        + n_pad * 4              # bias
        + B * num_classes * 4,   # f32 logits writeback
    )

    return pl.pallas_call(
        _classifier_head_kernel,
        out_shape=jax.ShapeDtypeStruct((B, num_classes), jnp.float32),
        grid=grid,
        in_specs=[
            # Activations: tiled over the batch grid axis, read straight from HBM
            # (partial edge block handled by Pallas; padded rows never stored).
            pl.BlockSpec((tm_eff, H), lambda i: (i, 0)),
            # Weight / bias: constant block index -> DMA'd once, stays resident.
            pl.BlockSpec((H, n_pad), lambda i: (0, 0)),
            pl.BlockSpec((1, n_pad), lambda i: (0, 0)),
        ],
        out_specs=pl.BlockSpec((tm_eff, num_classes), lambda i: (i, 0)),
        compiler_params=pltpu.CompilerParams(
            dimension_semantics=("parallel",),
        ),
        cost_estimate=cost,
    )(x, w_p, b_p)


if __name__ == "__main__":
    # Small shapes consistent with the module: batch=2, vec_size=32 (BERT hidden
    # size stand-in), out_features=3.
    batch, vec_size, num_classes = 2, 32, 3

    key = jax.random.PRNGKey(0)
    k_x, k_w, k_b = jax.random.split(key, 3)

    # Synthetic [CLS] pooled output standing in for self.bert(...).
    x = jax.random.normal(k_x, (batch, vec_size), dtype=jnp.float32)

    # Deterministic Linear(vec_size, 3) parameters in PyTorch (N, H) layout.
    w = jax.random.normal(k_w, (num_classes, vec_size), dtype=jnp.float32) * 0.02
    b = jax.random.normal(k_b, (num_classes,), dtype=jnp.float32) * 0.02

    # One-time parameter prep (hoisted out of the per-call path).
    w_p, b_p, n_out = prepare_classifier_params(w, b)

    logits = bbqq_classifier_head(x, w_p, b_p, n_out)
    jax.block_until_ready(logits)

    assert logits.shape == (batch, num_classes)

    # Reference with the same bf16 matmul precision / f32 accumulation.
    ref_bf16 = jnp.dot(
        x.astype(jnp.bfloat16), w.T.astype(jnp.bfloat16),
        preferred_element_type=jnp.float32) + b[None, :]
    assert jnp.allclose(logits, ref_bf16, atol=1e-3, rtol=1e-3)

    # Loose check against the full-f32 PyTorch Linear (bf16 input rounding only).
    ref_f32 = x @ w.T + b[None, :]
    assert jnp.allclose(logits, ref_f32, atol=2e-2, rtol=2e-2)

    print("KERNEL_OK")
</pallas_src>

<mosaic_0001>
module attributes {stable_mosaic.version = 11 : i64} {
  func.func @_classifier_head_kernel(%arg0: i32, %arg1: memref<8x32xf32, #tpu.memory_space<vmem>>, %arg2: memref<32x128xbf16, #tpu.memory_space<vmem>>, %arg3: memref<1x128xf32, #tpu.memory_space<vmem>>, %arg4: memref<8x3xf32, #tpu.memory_space<vmem>>) attributes {dimension_semantics = [#tpu.dimension_semantics<parallel>], iteration_bounds = array<i64: 1>, scalar_prefetch = 0 : i64, scratch_operands = 0 : i64, tpu.core_type = #tpu.core_type<tc>, window_params = [{transform_indices = @transform_0, window_bounds = array<i64: 8, 32>}, {pipeline_mode = #tpu.pipeline_mode<synchronous>, transform_indices = @transform_1, window_bounds = array<i64: 32, 128>}, {pipeline_mode = #tpu.pipeline_mode<synchronous>, transform_indices = @transform_2, window_bounds = array<i64: 1, 128>}, {transform_indices = @transform_3, window_bounds = array<i64: 8, 3>}]} {
    %c0 = arith.constant 0 : index
    %c0_0 = arith.constant 0 : index
    %0 = vector.load %arg1[%c0, %c0_0] : memref<8x32xf32, #tpu.memory_space<vmem>>, vector<8x32xf32>
    %1 = arith.truncf %0 : vector<8x32xf32> to vector<8x32xbf16>
    %c0_1 = arith.constant 0 : index
    %c0_2 = arith.constant 0 : index
    %2 = vector.load %arg2[%c0_1, %c0_2] : memref<32x128xbf16, #tpu.memory_space<vmem>>, vector<32x128xbf16>
    %cst = arith.constant dense<0.000000e+00> : vector<8x128xf32>
    %3 = tpu.matmul %1, %2, %cst {dimension_numbers = #tpu.dot_dimension_numbers<[1], [0], [0], [1], [0, 0, 1, 1], [], []>} : vector<8x32xbf16>, vector<32x128xbf16>, vector<8x128xf32> -> vector<8x128xf32>
    %c0_3 = arith.constant 0 : index
    %c0_4 = arith.constant 0 : index
    %4 = vector.load %arg3[%c0_3, %c0_4] : memref<1x128xf32, #tpu.memory_space<vmem>>, vector<1x128xf32>
    %5 = vector.broadcast %4 : vector<1x128xf32> to vector<8x128xf32>
    %6 = arith.addf %3, %5 : vector<8x128xf32>
    %7 = vector.extract_strided_slice %6 {offsets = [0, 0], sizes = [8, 3], strides = [1, 1]} : vector<8x128xf32> to vector<8x3xf32>
    %c0_5 = arith.constant 0 : index
    %c0_6 = arith.constant 0 : index
    %8 = vector.load %arg4[%c0_5, %c0_6] : memref<8x3xf32, #tpu.memory_space<vmem>>, vector<8x3xf32>
    tpu.vector_store %arg4[%c0_5, %c0_6], %7 {strides = array<i32>} : memref<8x3xf32, #tpu.memory_space<vmem>>, vector<8x3xf32>,
    return
  }
  func.func @transform_0(%arg0: i32) -> (i32, i32) {
    %c0_i32 = arith.constant 0 : i32
    %c0_i32_0 = arith.constant 0 : i32
    return %arg0, %c0_i32 : i32, i32
  }
  func.func @transform_1(%arg0: i32) -> (i32, i32) {
    %c0_i32 = arith.constant 0 : i32
    %c0_i32_0 = arith.constant 0 : i32
    %c0_i32_1 = arith.constant 0 : i32
    return %c0_i32, %c0_i32_0 : i32, i32
  }
  func.func @transform_2(%arg0: i32) -> (i32, i32) {
    %c0_i32 = arith.constant 0 : i32
    %c0_i32_0 = arith.constant 0 : i32
    %c0_i32_1 = arith.constant 0 : i32
    return %c0_i32, %c0_i32_0 : i32, i32
  }
  func.func @transform_3(%arg0: i32) -> (i32, i32) {
    %c0_i32 = arith.constant 0 : i32
    %c0_i32_0 = arith.constant 0 : i32
    return %arg0, %c0_i32 : i32, i32
  }
}

</mosaic_0001>

<llo_original>
// kernel: tpu_custom_call.1
$region0: #{tpu_custom_call.1}
  #allocation0 [shape = 'u32[]', space=smem, size = 0x4, offset = 0x4, fixed_abs, tag = 'smem constant byte address 0x4 - core index']
  #allocation1 [shape = 'u32[144,128]{1,0:T(1,128)}', space=vmem, size = 0x12000, scoped, tag = 'internal scratch']
  %s0 = inlined_call_operand.hbm [shape: f32[2,32], index: 0, kind: input, shape index: {}]
  %s1 = inlined_call_operand.hbm [shape: bf16[32,128], index: 1, kind: input, shape index: {}]
  %s2 = inlined_call_operand.vmem [shape: f32[1,128], index: 2, kind: input, shape index: {}]
  %s3 = inlined_call_operand.hbm [shape: f32[2,3], index: 3, kind: output, shape index: {}]
  %s4 = sld [smem:[#allocation0]]
  $region30: #{tpu_custom_call.1} parent=0
    _
  %s6 = ssub.s32 1, %s4
  %s7 = scalar_select 0, %s6, %s4
  $region1: #{tpu_custom_call.1} parent=0
    #allocation2 [shape = 'u8[4096]{0}', space=vmem, size = 0x1000, scoped, tag = 'input window, operand 0, single buffered']
    #allocation3 [shape = 's32[1]{0}', space=sflag, size = 0x4, scoped, tag = 'scoped memory for tpu_custom_call.1']
    #allocation4 [shape = 's32[1]{0}', space=sflag, size = 0x4, scoped, tag = 'scoped memory for tpu_custom_call.1']
    #allocation5 [shape = 'u8[8192]{0}', space=vmem, size = 0x2000, scoped, tag = 'input window, operand 1, single buffered']
    #allocation6 [shape = 's32[1]{0}', space=sflag, size = 0x4, scoped, tag = 'scoped memory for tpu_custom_call.1']
    #allocation7 [shape = 'u8[4096]{0}', space=vmem, size = 0x1000, scoped, tag = 'output window, operand 0, single buffered']
    %8 = vsyncpa [#allocation3], 0
    %9 = vsyncpa [#allocation6], 0
    %10 = vsyncpa [#allocation4], 0
    // Predicated region
    $region2: #{tpu_custom_call.1} parent=1 // pred_check
      _
    $region3: #{tpu_custom_call.1} parent=1 // pred_check_branch
      %12 = sbr.rel (0) target = $region5
    $region4: #{tpu_custom_call.1} parent=1 // pred_region
      %s14 = ssub.s32 128, 32
      %15 = vsyncadd [#allocation3], %s14
      %s16 = sshll.u32 [#allocation2], 4
      %s17 = int_to_ptr.vmem [resolvable:$true] %s16
      %22 = dma.hbm_to_vmem [thread:$0]  %s0, 32, %s17, [#allocation3], 32, 32, 2
    $region5: #{tpu_custom_call.1} parent=1 // pred_fallthru
      _
    // Predicated region
    $region6: #{tpu_custom_call.1} parent=1 // pred_check
      _
    $region7: #{tpu_custom_call.1} parent=1 // pred_check_branch
      %24 = sbr.rel (0) target = $region9
    $region8: #{tpu_custom_call.1} parent=1 // pred_region
      %s26 = ssub.s32 256, 256
      %27 = vsyncadd [#allocation6], %s26
      %s28 = sshll.u32 [#allocation5], 4
      %s29 = int_to_ptr.vmem [resolvable:$true] %s28
      %34 = dma.hbm_to_vmem [thread:$0]  %s1, 256, %s29, [#allocation6], 64, 64, 4
    $region9: #{tpu_custom_call.1} parent=1 // pred_fallthru
      _
    // Predicated region
    $region10: #{tpu_custom_call.1} parent=1 // pred_check
      _
    $region11: #{tpu_custom_call.1} parent=1 // pred_check_branch
      %36 = sbr.rel (0) target = $region13
    $region12: #{tpu_custom_call.1} parent=1 // pred_region
      _
    $region13: #{tpu_custom_call.1} parent=1 // pred_fallthru
      _
    // Predicated region
    $region14: #{tpu_custom_call.1} parent=1 // pred_check
      _
    $region15: #{tpu_custom_call.1} parent=1 // pred_check_branch
      %38 = sbr.rel (0) target = $region17
    $region16: #{tpu_custom_call.1} parent=1 // pred_region
      %39 = dma.done [#allocation3], 128
    $region17: #{tpu_custom_call.1} parent=1 // pred_fallthru
      _
    // Predicated region
    $region18: #{tpu_custom_call.1} parent=1 // pred_check
      _
    $region19: #{tpu_custom_call.1} parent=1 // pred_check_branch
      %41 = sbr.rel (0) target = $region21
    $region20: #{tpu_custom_call.1} parent=1 // pred_region
      %42 = dma.done [#allocation6], 256
    $region21: #{tpu_custom_call.1} parent=1 // pred_fallthru
      _
    %v44 = vld [vmem:[#allocation2] sm:$0xff]
    %v45 = vpack.c.bf16 %v44, %v44
    %v46 = vld [vmem:[#allocation5] sm:$0xf]
    %v47 = vld [vmem:[#allocation5 + $0x4] sm:$0xf]
    %v48 = vld [vmem:[#allocation5 + $0x8] sm:$0xf]
    %v49 = vld [vmem:[#allocation5 + $0xc] sm:$0xf]
    %v50 = vld [vmem:[%s2] sm:$0x1]
    %v52 = vlaneseq
    %v53 = vshrl.u32 %v52, 7
    %v54 = vsub.s32 0, %v53
    %v55 = vrot.slane %v50, %v54
    %v61 = vunpack.c.l.b16 %v46
    %v62 = vunpack.c.l.b16 %v47
    %v63 = vunpack.c.l.b16 %v48
    %v64 = vunpack.c.l.b16 %v49
    %v65 = vpack.c.b16 %v62, %v61
    %v66 = vpack.c.b16 %v64, %v63
    %vm69 = vcmask 261120
    %v71 = vsel %vm69, %v45, 0
    %73 = vmatprep.subr.bf16.mxu0 0
    %74 = vmatpush1.bf16.msra.mxu0 0
    %75 = vmatprep.subr.bf16.mxu0 0
    %76 = vmatpush1.bf16.msra.mxu0 0
    %77 = vmatprep.subr.bf16.mxu0 0
    %78 = vmatpush1.bf16.msra.mxu0 0
    %79 = vmatprep.subr.bf16.mxu0 0
    %80 = vmatpush1.bf16.msra.mxu0 0
    %81 = vmatprep.subr.bf16.mxu0 0
    %82 = vmatpush1.bf16.msra.mxu0 0
    %83 = vmatprep.subr.bf16.mxu0 0
    %84 = vmatpush1.bf16.msra.mxu0 0
    %85 = vmatprep.subr.bf16.mxu0 0
    %86 = vmatpush1.bf16.msra.mxu0 %v66
    %87 = vmatprep.subr.bf16.mxu0 0
    %88 = vmatpush1.bf16.msra.mxu0 %v65
    %89 = vmatprep.subr.bf16.mxu0 0
    %90 = vmatpush2.bf16.msra.mxu0 0
    %91 = vmatprep.subr.bf16.mxu0 0
    %92 = vmatpush2.bf16.msra.mxu0 0
    %93 = vmatprep.subr.bf16.mxu0 0
    %94 = vmatpush2.bf16.msra.mxu0 0
    %95 = vmatprep.subr.bf16.mxu0 0
    %96 = vmatpush2.bf16.msra.mxu0 0
    %97 = vmatprep.subr.bf16.mxu0 0
    %98 = vmatpush2.bf16.msra.mxu0 0
    %99 = vmatprep.subr.bf16.mxu0 0
    %100 = vmatpush2.bf16.msra.mxu0 0
    %101 = vmatprep.subr.bf16.mxu0 0
    %102 = vmatpush2.bf16.msra.mxu0 0
    %103 = vmatprep.subr.bf16.mxu0 0
    %104 = vmatpush2.bf16.msra.mxu0 0
    %105 = vmatprep.mubr.bf16.mxu0 0
    %106 = vmatmul.mubr.bf16.gmra.mxu0 %v71
    %v107 = vpop.f32.mrf.mxu0
    %v108 = vadd.f32 %v55, %v107
    %v109 = vpop.f32.mrf.mxu0
    %v110 = vpop.f32.mrf.mxu0
    %v111 = vpop.f32.mrf.mxu0
    %112 = vdwg.mxu0
    %vm113 = vcmask 23552
    %114 = vst.msk [vmem:[#allocation7] sm:$0xff] %vm113, %v108
    // Predicated region
    $region22: #{tpu_custom_call.1} parent=1 // pred_check
      _
    $region23: #{tpu_custom_call.1} parent=1 // pred_check_branch
      %116 = sbr.rel (0) target = $region25
    $region24: #{tpu_custom_call.1} parent=1 // pred_region
      %s118 = ssub.s32 128, 32
      %119 = vsyncadd [#allocation4], %s118
      %s120 = sshll.u32 [#allocation7], 4
      %s121 = int_to_ptr.vmem [resolvable:$true] %s120
      %126 = dma.vmem_to_hbm [thread:$0]  %s121, 32, %s3, [#allocation4], 32, 32, 2
    $region25: #{tpu_custom_call.1} parent=1 // pred_fallthru
      _
    // Predicated region
    $region26: #{tpu_custom_call.1} parent=1 // pred_check
      _
    $region27: #{tpu_custom_call.1} parent=1 // pred_check_branch
      %128 = sbr.rel (0) target = $region29
    $region28: #{tpu_custom_call.1} parent=1 // pred_region
      %129 = dma.done [#allocation4], 128
    $region29: #{tpu_custom_call.1} parent=1 // pred_fallthru
      _
    %130 = vsyncpa [#allocation3], 1
    %131 = vsyncpa [#allocation6], 1
    %132 = vsyncpa [#allocation4], 1

</llo_original>
